<compile_context>
chip_gen: v7x
topology: tpu7x:2x2x1
jax: 0.10.0
libtpu: 0.0.40
codegen_flags: <defaults>
</compile_context>

<pallas_src>
import jax
import jax.numpy as jnp
from jax.experimental import pallas as pl
from jax.experimental.pallas import tpu as pltpu


# Fuse stats + normalize into one HBM sweep when the f32 copy of x is at most
# this many bytes (keeps block + temporaries well inside scoped VMEM on v7x).
_FUSED_F32_BYTES = 4 << 20


def _pick_lane_tile(hw: int, c: int, itemsize: int) -> int:
    """Largest multiple-of-128 divisor of hw whose double-buffered in+out
    blocks stay comfortably inside scoped VMEM on all generations (incl. v7x)."""
    if hw <= 128 or hw % 128 != 0:
        # TODO(synk): non-128-multiple spatial extents fall back to a
        # full-extent block; a masked partial-tile variant would bound VMEM.
        return hw                                  # full-extent block
    budget_lanes = (3 << 20) // max(1, c * itemsize)
    target = max(128, min(2048, (budget_lanes // 128) * 128))
    t = (min(hw, target) // 128) * 128
    while t >= 128:
        if hw % t == 0:
            return t
        t -= 128
    return hw


def _make_fused_train_kernel(inv_m: float, eps: float):
    def kernel(x_ref, w_ref, b_ref, y_ref, mean_ref, var_ref):
        # x_ref: (N, C, HW) full block; w/b/mean/var: (C, 1) f32.
        x = x_ref[...].astype(jnp.float32)
        mean = jnp.sum(jnp.sum(x, axis=0), axis=-1, keepdims=True) * inv_m
        d = x - mean[None]
        var = jnp.sum(jnp.sum(d * d, axis=0), axis=-1, keepdims=True) * inv_m
        scale = w_ref[...] * jax.lax.rsqrt(var + eps)
        shift = b_ref[...] - mean * scale
        y_ref[...] = (x * scale[None] + shift[None]).astype(y_ref.dtype)
        mean_ref[...] = mean
        var_ref[...] = var
    return kernel


def _make_stats_kernel(inv_m: float):
    def stats_kernel(x_ref, mean_ref, var_ref, shift_ref, sum_ref, sumsq_ref):
        # x_ref: (C, T)   mean/var outputs & scratch: (C, 1) f32
        n_i, t_i = pl.program_id(0), pl.program_id(1)
        is_first = jnp.logical_and(n_i == 0, t_i == 0)
        is_last = jnp.logical_and(n_i == pl.num_programs(0) - 1,
                                  t_i == pl.num_programs(1) - 1)

        x = x_ref[...].astype(jnp.float32)

        @pl.when(is_first)
        def _():
            # Per-channel shift (mean of the first tile) keeps the shifted
            # sum / sum-of-squares accumulation numerically well conditioned.
            shift_ref[...] = jnp.mean(x, axis=-1, keepdims=True)
            sum_ref[...] = jnp.zeros_like(sum_ref)
            sumsq_ref[...] = jnp.zeros_like(sumsq_ref)

        d = x - shift_ref[...]
        sum_ref[...] += jnp.sum(d, axis=-1, keepdims=True)
        sumsq_ref[...] += jnp.sum(d * d, axis=-1, keepdims=True)

        @pl.when(is_last)
        def _():
            dm = sum_ref[...] * inv_m                        # E[x] - shift
            mean_ref[...] = shift_ref[...] + dm
            var_ref[...] = sumsq_ref[...] * inv_m - dm * dm  # biased variance

    return stats_kernel


def _normalize_kernel(x_ref, scale_ref, shift_ref, y_ref):
    # y = x * scale + shift : full BN affine folded per channel (1 mul + 1 add)
    x = x_ref[...].astype(jnp.float32)
    y_ref[...] = (x * scale_ref[...] + shift_ref[...]).astype(y_ref.dtype)


def my_batch_norm_forward(x, running_mean, running_var, weight, bias,
                          training=True, momentum=0.1, eps=1e-5):
    """Forward of MyBatchNormFunction.  x: (N, C, H, W).

    Returns (y, new_running_mean, new_running_var)."""
    N, C, H, W = x.shape
    HW = H * W
    M = N * HW
    itemsize = jnp.dtype(x.dtype).itemsize

    # Free reshape: no HBM data movement (unlike an NCHW->(C,M) transpose).
    x3 = x.reshape(N, C, HW)

    w_col = weight.astype(jnp.float32).reshape(C, 1)
    b_col = bias.astype(jnp.float32).reshape(C, 1)

    fused = training and (M * C * 4 <= _FUSED_F32_BYTES)

    if fused:
        # Single HBM sweep: read x once, write y once (vs 2 reads + 1 write).
        y3, batch_mean, batch_var = pl.pallas_call(
            _make_fused_train_kernel(1.0 / M, float(eps)),
            out_shape=(jax.ShapeDtypeStruct((N, C, HW), x.dtype),
                       jax.ShapeDtypeStruct((C, 1), jnp.float32),
                       jax.ShapeDtypeStruct((C, 1), jnp.float32)),
            grid_spec=pltpu.PrefetchScalarGridSpec(
                num_scalar_prefetch=0,
                grid=(1,),
                in_specs=[pl.BlockSpec((N, C, HW), lambda i: (0, 0, 0)),
                          pl.BlockSpec((C, 1), lambda i: (0, 0)),
                          pl.BlockSpec((C, 1), lambda i: (0, 0))],
                out_specs=[pl.BlockSpec((N, C, HW), lambda i: (0, 0, 0)),
                           pl.BlockSpec((C, 1), lambda i: (0, 0)),
                           pl.BlockSpec((C, 1), lambda i: (0, 0))]),
            compiler_params=pltpu.CompilerParams(
                dimension_semantics=("arbitrary",),
                vmem_limit_bytes=40 * 1024 * 1024),
        )(x3, w_col, b_col)
        mean = batch_mean.reshape(C)
        var = batch_var.reshape(C)
        y = y3.reshape(N, C, H, W)
    else:
        tile = _pick_lane_tile(HW, C, itemsize)
        n_tiles = HW // tile

        if training:
            batch_mean, batch_var = pl.pallas_call(
                _make_stats_kernel(1.0 / M),
                out_shape=(jax.ShapeDtypeStruct((C, 1), jnp.float32),
                           jax.ShapeDtypeStruct((C, 1), jnp.float32)),
                grid_spec=pltpu.PrefetchScalarGridSpec(
                    num_scalar_prefetch=0,
                    grid=(N, n_tiles),
                    in_specs=[pl.BlockSpec((None, C, tile),
                                           lambda n, t: (n, 0, t))],
                    out_specs=[pl.BlockSpec((C, 1), lambda n, t: (0, 0)),
                               pl.BlockSpec((C, 1), lambda n, t: (0, 0))],
                    scratch_shapes=[pltpu.VMEM((C, 1), jnp.float32),
                                    pltpu.VMEM((C, 1), jnp.float32),
                                    pltpu.VMEM((C, 1), jnp.float32)]),
                compiler_params=pltpu.CompilerParams(
                    dimension_semantics=("arbitrary", "arbitrary"),
                    vmem_limit_bytes=32 * 1024 * 1024),
            )(x3)
            mean = batch_mean.reshape(C)
            var = batch_var.reshape(C)
        else:
            mean = running_mean.astype(jnp.float32)
            var = running_var.astype(jnp.float32)

        # Tiny per-channel fold (C elements; rsqrt cost is negligible):
        inv_std = jax.lax.rsqrt(var + eps)
        scale = (weight.astype(jnp.float32) * inv_std).reshape(C, 1)
        shift = b_col - mean.reshape(C, 1) * scale

        y3 = pl.pallas_call(
            _normalize_kernel,
            out_shape=jax.ShapeDtypeStruct((N, C, HW), x.dtype),
            grid_spec=pltpu.PrefetchScalarGridSpec(
                num_scalar_prefetch=0,
                grid=(N, n_tiles),
                in_specs=[pl.BlockSpec((None, C, tile), lambda n, t: (n, 0, t)),
                          pl.BlockSpec((C, 1), lambda n, t: (0, 0)),
                          pl.BlockSpec((C, 1), lambda n, t: (0, 0))],
                out_specs=pl.BlockSpec((None, C, tile),
                                       lambda n, t: (n, 0, t))),
            compiler_params=pltpu.CompilerParams(
                dimension_semantics=("parallel", "parallel"),
                vmem_limit_bytes=32 * 1024 * 1024),
        )(x3, scale, shift)

        y = y3.reshape(N, C, H, W)

    if training:
        bessel = M / max(M - 1, 1)      # guard N*H*W == 1
        new_rm = (1.0 - momentum) * running_mean + momentum * mean
        new_rv = (1.0 - momentum) * running_var + momentum * var * bessel
    else:
        new_rm, new_rv = running_mean, running_var

    return y, new_rm, new_rv


def _reference(x, running_mean, running_var, weight, bias, momentum, eps,
               training=True):
    # Pure-JAX mirror of the PyTorch forward.
    if training:
        mean = jnp.mean(x, axis=(0, 2, 3))
        var = jnp.mean((x - mean.reshape(1, -1, 1, 1)) ** 2, axis=(0, 2, 3))
        M = x.shape[0] * x.shape[2] * x.shape[3]
        new_rm = (1 - momentum) * running_mean + momentum * mean
        new_rv = (1 - momentum) * running_var + momentum * var * M / (M - 1)
    else:
        mean, var = running_mean, running_var
        new_rm, new_rv = running_mean, running_var
    std = jnp.sqrt(var + eps).reshape(1, -1, 1, 1)
    y = ((x - mean.reshape(1, -1, 1, 1)) / std * weight.reshape(1, -1, 1, 1)
         + bias.reshape(1, -1, 1, 1))
    return y, new_rm, new_rv


if __name__ == "__main__":
    key = jax.random.PRNGKey(0)
    k_x, k_w, k_x2 = jax.random.split(key, 3)

    eps, momentum = 1e-5, 0.1

    # --- small shape (hits the fused single-sweep training path) ---
    N, C, H, W = 2, 4, 16, 16
    x = jax.random.normal(k_x, (N, C, H, W), dtype=jnp.float32)
    # reset_parameters(): weight ~ U[0,1), bias = 0
    weight = jax.random.uniform(k_w, (C,), dtype=jnp.float32)
    bias = jnp.zeros((C,), dtype=jnp.float32)
    running_mean = jnp.zeros((C,), dtype=jnp.float32)
    running_var = jnp.ones((C,), dtype=jnp.float32)

    y, new_rm, new_rv = my_batch_norm_forward(
        x, running_mean, running_var, weight, bias,
        training=True, momentum=momentum, eps=eps)
    jax.block_until_ready((y, new_rm, new_rv))

    y_ref, rm_ref, rv_ref = _reference(
        x, running_mean, running_var, weight, bias, momentum, eps, training=True)
    assert jnp.allclose(y, y_ref, atol=1e-5, rtol=1e-5), "train output mismatch"
    assert jnp.allclose(new_rm, rm_ref, atol=1e-5), "running_mean mismatch"
    assert jnp.allclose(new_rv, rv_ref, atol=1e-5), "running_var mismatch"

    # --- eval path (normalizes with running stats, buffers untouched) ---
    y_e, rm_e, rv_e = my_batch_norm_forward(
        x, running_mean, running_var, weight, bias,
        training=False, momentum=momentum, eps=eps)
    jax.block_until_ready((y_e, rm_e, rv_e))

    y_eref, _, _ = _reference(
        x, running_mean, running_var, weight, bias, momentum, eps, training=False)
    assert jnp.allclose(y_e, y_eref, atol=1e-5, rtol=1e-5), "eval output mismatch"
    assert jnp.allclose(rm_e, running_mean) and jnp.allclose(rv_e, running_var)

    # --- larger shape (hits the tiled two-pass training path) ---
    N2, C2, H2, W2 = 4, 8, 256, 256
    x2 = jax.random.normal(k_x2, (N2, C2, H2, W2), dtype=jnp.float32)
    w2 = jax.random.uniform(k_w, (C2,), dtype=jnp.float32)
    b2 = jnp.zeros((C2,), dtype=jnp.float32)
    rm2 = jnp.zeros((C2,), dtype=jnp.float32)
    rv2 = jnp.ones((C2,), dtype=jnp.float32)

    y2, nrm2, nrv2 = my_batch_norm_forward(
        x2, rm2, rv2, w2, b2, training=True, momentum=momentum, eps=eps)
    jax.block_until_ready((y2, nrm2, nrv2))

    y2_ref, rm2_ref, rv2_ref = _reference(
        x2, rm2, rv2, w2, b2, momentum, eps, training=True)
    assert jnp.allclose(y2, y2_ref, atol=1e-4, rtol=1e-4), "big train output mismatch"
    assert jnp.allclose(nrm2, rm2_ref, atol=1e-4), "big running_mean mismatch"
    assert jnp.allclose(nrv2, rv2_ref, atol=1e-4), "big running_var mismatch"

    print("KERNEL_OK")
</pallas_src>

<mosaic_0001>
module attributes {stable_mosaic.version = 11 : i64} {
  func.func @kernel(%arg0: i32, %arg1: memref<2x4x256xf32, #tpu.memory_space<vmem>>, %arg2: memref<4x1xf32, #tpu.memory_space<vmem>>, %arg3: memref<4x1xf32, #tpu.memory_space<vmem>>, %arg4: memref<2x4x256xf32, #tpu.memory_space<vmem>>, %arg5: memref<4x1xf32, #tpu.memory_space<vmem>>, %arg6: memref<4x1xf32, #tpu.memory_space<vmem>>) attributes {dimension_semantics = [#tpu.dimension_semantics<arbitrary>], iteration_bounds = array<i64: 1>, scalar_prefetch = 0 : i64, scratch_operands = 0 : i64, tpu.core_type = #tpu.core_type<tc>, window_params = [{pipeline_mode = #tpu.pipeline_mode<synchronous>, transform_indices = @transform_0, window_bounds = array<i64: 2, 4, 256>}, {pipeline_mode = #tpu.pipeline_mode<synchronous>, transform_indices = @transform_1, window_bounds = array<i64: 4, 1>}, {pipeline_mode = #tpu.pipeline_mode<synchronous>, transform_indices = @transform_2, window_bounds = array<i64: 4, 1>}, {pipeline_mode = #tpu.pipeline_mode<synchronous>, transform_indices = @transform_3, window_bounds = array<i64: 2, 4, 256>}, {pipeline_mode = #tpu.pipeline_mode<synchronous>, transform_indices = @transform_4, window_bounds = array<i64: 4, 1>}, {pipeline_mode = #tpu.pipeline_mode<synchronous>, transform_indices = @transform_5, window_bounds = array<i64: 4, 1>}]} {
    %c0 = arith.constant 0 : index
    %c0_0 = arith.constant 0 : index
    %c0_1 = arith.constant 0 : index
    %0 = vector.load %arg1[%c0, %c0_0, %c0_1] : memref<2x4x256xf32, #tpu.memory_space<vmem>>, vector<2x4x256xf32>
    %cst = arith.constant dense<0.000000e+00> : vector<4x256xf32>
    %1 = vector.multi_reduction <add>, %0, %cst [0] : vector<2x4x256xf32> to vector<4x256xf32>
    %cst_2 = arith.constant dense<0.000000e+00> : vector<4xf32>
    %2 = vector.multi_reduction <add>, %1, %cst_2 [1] : vector<4x256xf32> to vector<4xf32>
    %3 = vector.shape_cast %2 : vector<4xf32> to vector<4x1xf32>
    %cst_3 = arith.constant 0.001953125 : f32
    %4 = vector.broadcast %cst_3 : f32 to vector<4x1xf32>
    %5 = arith.mulf %3, %4 : vector<4x1xf32>
    %6 = vector.shape_cast %5 : vector<4x1xf32> to vector<1x4x1xf32>
    %7 = vector.broadcast %6 : vector<1x4x1xf32> to vector<2x4x256xf32>
    %8 = arith.subf %0, %7 : vector<2x4x256xf32>
    %9 = arith.mulf %8, %8 : vector<2x4x256xf32>
    %cst_4 = arith.constant dense<0.000000e+00> : vector<4x256xf32>
    %10 = vector.multi_reduction <add>, %9, %cst_4 [0] : vector<2x4x256xf32> to vector<4x256xf32>
    %cst_5 = arith.constant dense<0.000000e+00> : vector<4xf32>
    %11 = vector.multi_reduction <add>, %10, %cst_5 [1] : vector<4x256xf32> to vector<4xf32>
    %12 = vector.shape_cast %11 : vector<4xf32> to vector<4x1xf32>
    %cst_6 = arith.constant 0.001953125 : f32
    %13 = vector.broadcast %cst_6 : f32 to vector<4x1xf32>
    %14 = arith.mulf %12, %13 : vector<4x1xf32>
    %c0_7 = arith.constant 0 : index
    %c0_8 = arith.constant 0 : index
    %15 = vector.load %arg2[%c0_7, %c0_8] : memref<4x1xf32, #tpu.memory_space<vmem>>, vector<4x1xf32>
    %cst_9 = arith.constant 9.99999974E-6 : f32
    %16 = vector.broadcast %cst_9 : f32 to vector<4x1xf32>
    %17 = arith.addf %14, %16 : vector<4x1xf32>
    %18 = math.rsqrt %17 : vector<4x1xf32>
    %19 = arith.mulf %15, %18 : vector<4x1xf32>
    %c0_10 = arith.constant 0 : index
    %c0_11 = arith.constant 0 : index
    %20 = vector.load %arg3[%c0_10, %c0_11] : memref<4x1xf32, #tpu.memory_space<vmem>>, vector<4x1xf32>
    %21 = arith.mulf %5, %19 : vector<4x1xf32>
    %22 = arith.subf %20, %21 : vector<4x1xf32>
    %23 = vector.shape_cast %19 : vector<4x1xf32> to vector<1x4x1xf32>
    %24 = vector.broadcast %23 : vector<1x4x1xf32> to vector<2x4x256xf32>
    %25 = arith.mulf %0, %24 : vector<2x4x256xf32>
    %26 = vector.shape_cast %22 : vector<4x1xf32> to vector<1x4x1xf32>
    %27 = vector.broadcast %26 : vector<1x4x1xf32> to vector<2x4x256xf32>
    %28 = arith.addf %25, %27 : vector<2x4x256xf32>
    %c0_12 = arith.constant 0 : index
    %c0_13 = arith.constant 0 : index
    %c0_14 = arith.constant 0 : index
    %29 = vector.load %arg4[%c0_12, %c0_13, %c0_14] : memref<2x4x256xf32, #tpu.memory_space<vmem>>, vector<2x4x256xf32>
    tpu.vector_store %arg4[%c0_12, %c0_13, %c0_14], %28 {strides = array<i32>} : memref<2x4x256xf32, #tpu.memory_space<vmem>>, vector<2x4x256xf32>,
    %c0_15 = arith.constant 0 : index
    %c0_16 = arith.constant 0 : index
    %30 = vector.load %arg5[%c0_15, %c0_16] : memref<4x1xf32, #tpu.memory_space<vmem>>, vector<4x1xf32>
    tpu.vector_store %arg5[%c0_15, %c0_16], %5 {strides = array<i32>} : memref<4x1xf32, #tpu.memory_space<vmem>>, vector<4x1xf32>,
    %c0_17 = arith.constant 0 : index
    %c0_18 = arith.constant 0 : index
    %31 = vector.load %arg6[%c0_17, %c0_18] : memref<4x1xf32, #tpu.memory_space<vmem>>, vector<4x1xf32>
    tpu.vector_store %arg6[%c0_17, %c0_18], %14 {strides = array<i32>} : memref<4x1xf32, #tpu.memory_space<vmem>>, vector<4x1xf32>,
    return
  }
  func.func @transform_0(%arg0: i32) -> (i32, i32, i32) {
    %c0_i32 = arith.constant 0 : i32
    %c0_i32_0 = arith.constant 0 : i32
    %c0_i32_1 = arith.constant 0 : i32
    %c0_i32_2 = arith.constant 0 : i32
    return %c0_i32, %c0_i32_0, %c0_i32_1 : i32, i32, i32
  }
  func.func @transform_1(%arg0: i32) -> (i32, i32) {
    %c0_i32 = arith.constant 0 : i32
    %c0_i32_0 = arith.constant 0 : i32
    %c0_i32_1 = arith.constant 0 : i32
    return %c0_i32, %c0_i32_0 : i32, i32
  }
  func.func @transform_2(%arg0: i32) -> (i32, i32) {
    %c0_i32 = arith.constant 0 : i32
    %c0_i32_0 = arith.constant 0 : i32
    %c0_i32_1 = arith.constant 0 : i32
    return %c0_i32, %c0_i32_0 : i32, i32
  }
  func.func @transform_3(%arg0: i32) -> (i32, i32, i32) {
    %c0_i32 = arith.constant 0 : i32
    %c0_i32_0 = arith.constant 0 : i32
    %c0_i32_1 = arith.constant 0 : i32
    %c0_i32_2 = arith.constant 0 : i32
    return %c0_i32, %c0_i32_0, %c0_i32_1 : i32, i32, i32
  }
  func.func @transform_4(%arg0: i32) -> (i32, i32) {
    %c0_i32 = arith.constant 0 : i32
    %c0_i32_0 = arith.constant 0 : i32
    %c0_i32_1 = arith.constant 0 : i32
    return %c0_i32, %c0_i32_0 : i32, i32
  }
  func.func @transform_5(%arg0: i32) -> (i32, i32) {
    %c0_i32 = arith.constant 0 : i32
    %c0_i32_0 = arith.constant 0 : i32
    %c0_i32_1 = arith.constant 0 : i32
    return %c0_i32, %c0_i32_0 : i32, i32
  }
}

</mosaic_0001>

<llo_original>
// kernel: tpu_custom_call.1
$region0: #{tpu_custom_call.1}
  #allocation0 [shape = 'u32[]', space=smem, size = 0x4, offset = 0x4, fixed_abs, tag = 'smem constant byte address 0x4 - core index']
  #allocation1 [shape = 'u32[144,128]{1,0:T(1,128)}', space=vmem, size = 0x12000, scoped, tag = 'internal scratch']
  %s0 = inlined_call_operand.hbm [shape: f32[2,4,256], index: 0, kind: input, shape index: {}]
  %s1 = inlined_call_operand.vmem [shape: f32[4,1], index: 1, kind: input, shape index: {}]
  %s2 = inlined_call_operand.vmem [shape: f32[4,1], index: 2, kind: input, shape index: {}]
  %s3 = inlined_call_operand.hbm [shape: f32[2,4,256], index: 3, kind: output, shape index: {0}]
  %s4 = inlined_call_operand.vmem [shape: f32[4,1], index: 4, kind: output, shape index: {1}]
  %s5 = inlined_call_operand.vmem [shape: f32[4,1], index: 5, kind: output, shape index: {2}]
  %6 = xla_tuple %s3, %s4, %s5
  %s7 = sld [smem:[#allocation0]]
  $region42: #{tpu_custom_call.1} parent=0
    _
  %s9 = ssub.s32 1, %s7
  %s10 = scalar_select 0, %s9, %s7
  $region1: #{tpu_custom_call.1} parent=0
    #allocation2 [shape = 'u8[8192]{0}', space=vmem, size = 0x2000, scoped, tag = 'input window, operand 0, single buffered']
    #allocation3 [shape = 's32[1]{0}', space=sflag, size = 0x4, scoped, tag = 'scoped memory for tpu_custom_call.1']
    #allocation4 [shape = 's32[1]{0}', space=sflag, size = 0x4, scoped, tag = 'scoped memory for tpu_custom_call.1']
    #allocation5 [shape = 'u8[8192]{0}', space=vmem, size = 0x2000, scoped, tag = 'output window, operand 0, single buffered']
    %11 = vsyncpa [#allocation3], 0
    %12 = vsyncpa [#allocation4], 0
    // Predicated region
    $region2: #{tpu_custom_call.1} parent=1 // pred_check
      _
    $region3: #{tpu_custom_call.1} parent=1 // pred_check_branch
      %14 = sbr.rel (0) target = $region5
    $region4: #{tpu_custom_call.1} parent=1 // pred_region
      %s16 = ssub.s32 256, 256
      %17 = vsyncadd [#allocation3], %s16
      %s18 = sshll.u32 [#allocation2], 4
      %s19 = int_to_ptr.vmem [resolvable:$true] %s18
      %24 = dma.hbm_to_vmem [thread:$0]  %s0, 256, %s19, [#allocation3], 128, 128, 8
    $region5: #{tpu_custom_call.1} parent=1 // pred_fallthru
      _
    // Predicated region
    $region6: #{tpu_custom_call.1} parent=1 // pred_check
      _
    $region7: #{tpu_custom_call.1} parent=1 // pred_check_branch
      %26 = sbr.rel (0) target = $region9
    $region8: #{tpu_custom_call.1} parent=1 // pred_region
      _
    $region9: #{tpu_custom_call.1} parent=1 // pred_fallthru
      _
    // Predicated region
    $region10: #{tpu_custom_call.1} parent=1 // pred_check
      _
    $region11: #{tpu_custom_call.1} parent=1 // pred_check_branch
      %28 = sbr.rel (0) target = $region13
    $region12: #{tpu_custom_call.1} parent=1 // pred_region
      _
    $region13: #{tpu_custom_call.1} parent=1 // pred_fallthru
      _
    // Predicated region
    $region14: #{tpu_custom_call.1} parent=1 // pred_check
      _
    $region15: #{tpu_custom_call.1} parent=1 // pred_check_branch
      %30 = sbr.rel (0) target = $region17
    $region16: #{tpu_custom_call.1} parent=1 // pred_region
      %31 = dma.done [#allocation3], 256
    $region17: #{tpu_custom_call.1} parent=1 // pred_fallthru
      _
    %v32 = vld [vmem:[#allocation2] sm:$0xff]
    %v33 = vld [vmem:[#allocation2 + $0x8] sm:$0xff]
    %v36 = vcombine.high %v32, %v32
    %v37 = vcombine.high %v33, %v33
    %vm40 = vcmask 1043456
    %v41 = vsel %vm40, %v32, 0.0
    %v42 = vsel %vm40, %v33, 0.0
    %v43 = vadd.f32 %v41, %v42
    %v44 = vsel %vm40, %v36, 0.0
    %v45 = vsel %vm40, %v37, 0.0
    %v46 = vadd.f32 %v44, %v45
    %v47 = vsel %vm40, %v43, 0.0
    %v48 = vsel %vm40, %v46, 0.0
    %v49 = vadd.f32 %v47, %v48
    %50 = vadd.xlane.f32.xlu0 %v49
    %v51 = vpop.xlane.xlu0 %50
    %v52 = vmul.f32 %v51, 0.001953125
    %v55 = vunpack.c.l.s4 839922192
    %v56 = vunpack.c.0.s8 %v55
    %v57 = vlaneseq
    %v58 = vshrl.u32 %v57, 7
    %v59 = vsub.s32 %v56, %v58
    %v60 = vrot.slane %v52, %v59
    %v62 = vsub.f32 %v32, %v60
    %v63 = vsub.f32 %v33, %v60
    %v64 = vmul.f32 %v62, %v62
    %v65 = vmul.f32 %v63, %v63
    %v68 = vcombine.high %v64, %v64
    %v69 = vcombine.high %v65, %v65
    %v72 = vsel %vm40, %v64, 0.0
    %v73 = vsel %vm40, %v65, 0.0
    %v74 = vadd.f32 %v72, %v73
    %v75 = vsel %vm40, %v68, 0.0
    %v76 = vsel %vm40, %v69, 0.0
    %v77 = vadd.f32 %v75, %v76
    %v78 = vsel %vm40, %v74, 0.0
    %v79 = vsel %vm40, %v77, 0.0
    %v80 = vadd.f32 %v78, %v79
    %81 = vadd.xlane.f32.xlu0 %v80
    %v82 = vpop.xlane.xlu0 %81
    %v83 = vmul.f32 %v82, 0.001953125
    %v84 = vld [vmem:[%s1] sm:$0xf]
    %v85 = vadd.f32 %v83, 1e-05
    %v86 = vrsqrt.pop %v85
    %v87 = vmul.f32 %v84, %v86
    %v88 = vld [vmem:[%s2] sm:$0xf]
    %v89 = vmul.f32 %v52, %v87
    %v90 = vsub.f32 %v88, %v89
    %92 = vset.pattern.permute.xlu0 0
    %93 = vperm.xlu0 %92, %v87
    %v94 = vpop.permute.xlu0 %93
    %v96 = vunpack.c.l.s4 839922192
    %v97 = vunpack.c.0.s8 %v96
    %v98 = vlaneseq
    %v99 = vshrl.u32 %v98, 7
    %v100 = vsub.s32 %v97, %v99
    %v101 = vrot.slane %v94, %v100
    %v103 = vmul.f32 %v32, %v101
    %v104 = vmul.f32 %v33, %v101
    %106 = vset.pattern.permute.xlu0 0
    %107 = vperm.xlu0 %106, %v90
    %v108 = vpop.permute.xlu0 %107
    %v110 = vunpack.c.l.s4 839922192
    %v111 = vunpack.c.0.s8 %v110
    %v112 = vlaneseq
    %v113 = vshrl.u32 %v112, 7
    %v114 = vsub.s32 %v111, %v113
    %v115 = vrot.slane %v108, %v114
    %v117 = vadd.f32 %v103, %v115
    %v118 = vadd.f32 %v104, %v115
    %119 = vst [vmem:[#allocation5] sm:$0xff] %v117
    %120 = vst [vmem:[#allocation5 + $0x8] sm:$0xff] %v118
    %vm121 = vcmask 3072
    %122 = vst.msk [vmem:[%s4] sm:$0xf] %vm121, %v52
    %123 = vst.msk [vmem:[%s5] sm:$0xf] %vm121, %v83
    // Predicated region
    $region18: #{tpu_custom_call.1} parent=1 // pred_check
      _
    $region19: #{tpu_custom_call.1} parent=1 // pred_check_branch
      %125 = sbr.rel (0) target = $region21
    $region20: #{tpu_custom_call.1} parent=1 // pred_region
      %s127 = ssub.s32 256, 256
      %128 = vsyncadd [#allocation4], %s127
      %s129 = sshll.u32 [#allocation5], 4
      %s130 = int_to_ptr.vmem [resolvable:$true] %s129
      %135 = dma.vmem_to_hbm [thread:$0]  %s130, 256, %s3, [#allocation4], 128, 128, 8
    $region21: #{tpu_custom_call.1} parent=1 // pred_fallthru
      _
    // Predicated region
    $region22: #{tpu_custom_call.1} parent=1 // pred_check
      _
    $region23: #{tpu_custom_call.1} parent=1 // pred_check_branch
      %137 = sbr.rel (0) target = $region25
    $region24: #{tpu_custom_call.1} parent=1 // pred_region
      _
    $region25: #{tpu_custom_call.1} parent=1 // pred_fallthru
      _
    // Predicated region
    $region26: #{tpu_custom_call.1} parent=1 // pred_check
      _
    $region27: #{tpu_custom_call.1} parent=1 // pred_check_branch
      %139 = sbr.rel (0) target = $region29
    $region28: #{tpu_custom_call.1} parent=1 // pred_region
      _
    $region29: #{tpu_custom_call.1} parent=1 // pred_fallthru
      _
    // Predicated region
    $region30: #{tpu_custom_call.1} parent=1 // pred_check
      _
    $region31: #{tpu_custom_call.1} parent=1 // pred_check_branch
      %141 = sbr.rel (0) target = $region33
    $region32: #{tpu_custom_call.1} parent=1 // pred_region
      %142 = dma.done [#allocation4], 256
    $region33: #{tpu_custom_call.1} parent=1 // pred_fallthru
      _
    // Predicated region
    $region34: #{tpu_custom_call.1} parent=1 // pred_check
      _
    $region35: #{tpu_custom_call.1} parent=1 // pred_check_branch
      %144 = sbr.rel (0) target = $region37
    $region36: #{tpu_custom_call.1} parent=1 // pred_region
      _
    $region37: #{tpu_custom_call.1} parent=1 // pred_fallthru
      _
    // Predicated region
    $region38: #{tpu_custom_call.1} parent=1 // pred_check
      _
    $region39: #{tpu_custom_call.1} parent=1 // pred_check_branch
      %146 = sbr.rel (0) target = $region41
    $region40: #{tpu_custom_call.1} parent=1 // pred_region
      _
    $region41: #{tpu_custom_call.1} parent=1 // pred_fallthru
      _
    %147 = vsyncpa [#allocation3], 1
    %148 = vsyncpa [#allocation4], 1

</llo_original>
